<compile_context>
chip_gen: v7x
topology: tpu7x:2x2x1
jax: 0.10.0
libtpu: 0.0.40
codegen_flags: <defaults>
</compile_context>

<pallas_src>
import math

import jax
import jax.numpy as jnp
from jax.experimental import pallas as pl
from jax.experimental.pallas import tpu as pltpu


def _fused_mlp_kernel(x_ref, w_ref, y_ref, std_ref):
    """Grid axis 0 = layer index. One layer: y_ref = relu(y_ref @ w); std[i]."""
    i = pl.program_id(0)

    # Seed the resident activation (the output block itself) with the input.
    @pl.when(i == 0)
    def _():
        y_ref[...] = x_ref[...]

    # bf16 matmul inputs, f32 accumulation (MXU-native on all generations).
    a = y_ref[...].astype(jnp.bfloat16)
    y = jnp.dot(a, w_ref[...], preferred_element_type=jnp.float32)
    y = jnp.maximum(y, 0.0)            # ReLU (f32)
    y_ref[...] = y                     # stays resident for the next layer

    # torch.Tensor.std(): unbiased (ddof=1) std over all elements.
    # Two-pass (center first) to avoid cancellation of the one-pass form.
    n = y.shape[0] * y.shape[1]
    mean = jnp.sum(y) / n
    d = y - mean
    var = jnp.sum(d * d) / (n - 1)
    std_ref[i] = jnp.sqrt(var)


def _build_specs(B, N, single_buffer_resident):
    """BlockSpecs; optionally single-buffer the constant-index blocks."""
    if single_buffer_resident:
        x_spec = pl.BlockSpec((B, N), lambda i: (0, 0),
                              pipeline_mode=pl.Buffered(1))
        y_spec = pl.BlockSpec((B, N), lambda i: (0, 0),
                              pipeline_mode=pl.Buffered(1))
    else:
        x_spec = pl.BlockSpec((B, N), lambda i: (0, 0))
        y_spec = pl.BlockSpec((B, N), lambda i: (0, 0))
    w_spec = pl.BlockSpec((None, N, N), lambda i: (i, 0, 0))
    return x_spec, w_spec, y_spec


def mlp_forward_fused(x, w_stack_t, *, single_buffer_resident=True):
    """Single pallas_call running all L layers.

    Args:
      x:         (B, N) float32 input.
      w_stack_t: (L, N, N) bfloat16, each slice already transposed to
                 (in_features, out_features) layout.

    Returns:
      (y, stds): final (B, N) f32 activation and per-layer (L,) unbiased stds.
    """
    B, N = x.shape
    L = w_stack_t.shape[0]
    assert w_stack_t.shape == (L, N, N)

    x_spec, w_spec, y_spec = _build_specs(B, N, single_buffer_resident)

    # Explicit VMEM budget: double-buffered bf16 weight slab + resident
    # x / y blocks + headroom; clamped so the request is legal everywhere
    # (v7x physical VMEM is 64 MiB; v5e/v6e default scoped limit is 16/32).
    w_bytes = 2 * N * N * w_stack_t.dtype.itemsize
    act_bytes = 2 * B * N * 4
    working_set = w_bytes + act_bytes + (2 << 20)
    vmem_limit = int(min(64 * 1024 * 1024, max(16 * 1024 * 1024, working_set)))

    return pl.pallas_call(
        _fused_mlp_kernel,
        out_shape=(
            jax.ShapeDtypeStruct((B, N), jnp.float32),
            jax.ShapeDtypeStruct((L,), jnp.float32),
        ),
        grid=(L,),
        in_specs=[
            x_spec,   # input activation, read only on layer 0
            w_spec,   # per-layer bf16 weight slab (layer dim squeezed away)
        ],
        out_specs=(
            y_spec,   # final activation; doubles as resident accumulator
            pl.BlockSpec(memory_space=pltpu.SMEM),   # (L,) per-layer stds
        ),
        compiler_params=pltpu.CompilerParams(
            dimension_semantics=("arbitrary",),      # layer chain is sequential
            vmem_limit_bytes=vmem_limit,
        ),
    )(x, w_stack_t)


def init_weights(key, neural_num, layers):
    """kaiming_normal_ (fan_in, gain=sqrt(2)) init, nn.Linear (out, in) layout."""
    std = (2.0 / neural_num) ** 0.5
    keys = jax.random.split(key, layers)
    return [std * jax.random.normal(k, (neural_num, neural_num), dtype=jnp.float32)
            for k in keys]


def stack_weights_for_kernel(weights):
    """One-time prep (done at init, NOT per forward): transpose each nn.Linear
    (out, in) weight to (in, out), stack to (L, N, N) and cast to bf16."""
    return jnp.stack([w.T for w in weights], axis=0).astype(jnp.bfloat16)


def mlp_forward(x, w_stack_t):
    """Reproduces MLP.forward semantics with one fused kernel + one host sync.

    The per-layer print / NaN message is emitted on the host after the single
    fused call; unlike PyTorch's early break, later layers still execute on
    device (output is identical unless a NaN actually occurs).
    """
    try:
        y, stds = mlp_forward_fused(x, w_stack_t, single_buffer_resident=True)
    except Exception:
        # Fallback for jax builds without BlockSpec(pipeline_mode=...):
        # identical kernel, default double-buffering of the resident blocks.
        y, stds = mlp_forward_fused(x, w_stack_t, single_buffer_resident=False)

    y, stds = jax.block_until_ready((y, stds))     # single device sync

    for i, s in enumerate(list(jax.device_get(stds))):
        print('layer:{}, std:{}'.format(i, float(s)))
        if math.isnan(float(s)):
            # TODO(synk): PyTorch breaks before running later layers; here all
            # layers already ran on device, only the printing stops early.
            print('output is nan in {} layers'.format(i))
            break
    return y, stds


if __name__ == "__main__":
    neural_num = 128
    layers = 4
    batch = 16

    key = jax.random.PRNGKey(0)
    k_x, k_w = jax.random.split(key)

    x = jax.random.normal(k_x, (batch, neural_num), dtype=jnp.float32)
    weights = init_weights(k_w, neural_num, layers)

    # Hoisted out of the forward path: built once, reused for every forward.
    w_stack_t = stack_weights_for_kernel(weights)

    out, stds = mlp_forward(x, w_stack_t)
    out = jax.block_until_ready(out)

    # Sanity check against a plain-JAX reference using the SAME bf16 weights
    # and f32 accumulation (tolerances account for accumulation-order drift).
    ref = x
    ref_stds = []
    for l in range(layers):
        ref = jnp.maximum(
            jnp.dot(ref.astype(jnp.bfloat16), w_stack_t[l],
                    preferred_element_type=jnp.float32),
            0.0)
        ref_stds.append(jnp.std(ref, ddof=1))
    ref_stds = jnp.stack(ref_stds)

    assert jnp.allclose(out, ref, atol=5e-3, rtol=5e-3), "activation mismatch"
    assert jnp.allclose(stds, ref_stds, atol=5e-3, rtol=5e-3), "std mismatch"

    print("KERNEL_OK")
</pallas_src>

<mosaic_0001>
module attributes {stable_mosaic.version = 11 : i64} {
  func.func @_fused_mlp_kernel(%arg0: i32, %arg1: memref<16x128xf32, #tpu.memory_space<vmem>>, %arg2: memref<1x128x128xbf16, #tpu.memory_space<vmem>>, %arg3: memref<16x128xf32, #tpu.memory_space<vmem>>, %arg4: memref<4xf32, #tpu.memory_space<smem>>) attributes {dimension_semantics = [#tpu.dimension_semantics<arbitrary>], iteration_bounds = array<i64: 4>, scalar_prefetch = 0 : i64, scratch_operands = 0 : i64, tpu.core_type = #tpu.core_type<tc>, window_params = [{pipeline_mode = #tpu.pipeline_mode<synchronous>, transform_indices = @transform_0, window_bounds = array<i64: 16, 128>}, {transform_indices = @transform_1, window_bounds = array<i64: 1, 128, 128>}, {pipeline_mode = #tpu.pipeline_mode<synchronous>, transform_indices = @transform_2, window_bounds = array<i64: 16, 128>}, {transform_indices = @transform_3, window_bounds = array<i64: 4>}]} {
    %c0_i32 = arith.constant 0 : i32
    %0 = arith.cmpi eq, %arg0, %c0_i32 : i32
    %1 = arith.extui %0 : i1 to i32
    %c0_i32_0 = arith.constant 0 : i32
    %2 = arith.cmpi ne, %1, %c0_i32_0 : i32
    scf.if %2 {
      %c0_12 = arith.constant 0 : index
      %c0_13 = arith.constant 0 : index
      %27 = vector.load %arg1[%c0_12, %c0_13] : memref<16x128xf32, #tpu.memory_space<vmem>>, vector<16x128xf32>
      %c0_14 = arith.constant 0 : index
      %c0_15 = arith.constant 0 : index
      %28 = vector.load %arg3[%c0_14, %c0_15] : memref<16x128xf32, #tpu.memory_space<vmem>>, vector<16x128xf32>
      tpu.vector_store %arg3[%c0_14, %c0_15], %27 {strides = array<i32>} : memref<16x128xf32, #tpu.memory_space<vmem>>, vector<16x128xf32>,
    } else {
    }
    %c0 = arith.constant 0 : index
    %c0_1 = arith.constant 0 : index
    %3 = vector.load %arg3[%c0, %c0_1] : memref<16x128xf32, #tpu.memory_space<vmem>>, vector<16x128xf32>
    %4 = arith.truncf %3 : vector<16x128xf32> to vector<16x128xbf16>
    %c0_2 = arith.constant 0 : index
    %c0_3 = arith.constant 0 : index
    %c0_4 = arith.constant 0 : index
    %5 = vector.load %arg2[%c0_2, %c0_3, %c0_4] : memref<1x128x128xbf16, #tpu.memory_space<vmem>>, vector<1x128x128xbf16>
    %6 = vector.shape_cast %5 : vector<1x128x128xbf16> to vector<128x128xbf16>
    %cst = arith.constant dense<0.000000e+00> : vector<16x128xf32>
    %7 = tpu.matmul %4, %6, %cst {dimension_numbers = #tpu.dot_dimension_numbers<[1], [0], [0], [1], [0, 0, 1, 1], [], []>} : vector<16x128xbf16>, vector<128x128xbf16>, vector<16x128xf32> -> vector<16x128xf32>
    %cst_5 = arith.constant 0.000000e+00 : f32
    %8 = vector.broadcast %cst_5 : f32 to vector<16x128xf32>
    %9 = arith.maximumf %7, %8 : vector<16x128xf32>
    %c0_6 = arith.constant 0 : index
    %c0_7 = arith.constant 0 : index
    %10 = vector.load %arg3[%c0_6, %c0_7] : memref<16x128xf32, #tpu.memory_space<vmem>>, vector<16x128xf32>
    tpu.vector_store %arg3[%c0_6, %c0_7], %9 {strides = array<i32>} : memref<16x128xf32, #tpu.memory_space<vmem>>, vector<16x128xf32>,
    %11 = vector.shape_cast %9 : vector<16x128xf32> to vector<1x16x128xf32>
    %cst_8 = arith.constant dense<0.000000e+00> : vector<1xf32>
    %12 = vector.multi_reduction <add>, %11, %cst_8 [1, 2] : vector<1x16x128xf32> to vector<1xf32>
    %13 = vector.shape_cast %12 : vector<1xf32> to vector<1x1x1xf32>
    %14 = vector.extract %13[0, 0, 0] : f32 from vector<1x1x1xf32>
    %cst_9 = arith.constant 2.048000e+03 : f32
    %15 = arith.divf %14, %cst_9 : f32
    %16 = vector.broadcast %15 : f32 to vector<16x128xf32>
    %17 = arith.subf %9, %16 : vector<16x128xf32>
    %18 = arith.mulf %17, %17 : vector<16x128xf32>
    %19 = vector.shape_cast %18 : vector<16x128xf32> to vector<1x16x128xf32>
    %cst_10 = arith.constant dense<0.000000e+00> : vector<1xf32>
    %20 = vector.multi_reduction <add>, %19, %cst_10 [1, 2] : vector<1x16x128xf32> to vector<1xf32>
    %21 = vector.shape_cast %20 : vector<1xf32> to vector<1x1x1xf32>
    %22 = vector.extract %21[0, 0, 0] : f32 from vector<1x1x1xf32>
    %cst_11 = arith.constant 2.047000e+03 : f32
    %23 = arith.divf %22, %cst_11 : f32
    %24 = math.sqrt %23 : f32
    %25 = arith.index_cast %arg0 : i32 to index
    %26 = memref.load %arg4[%25] : memref<4xf32, #tpu.memory_space<smem>>
    memref.store %24, %arg4[%25] : memref<4xf32, #tpu.memory_space<smem>>
    return
  }
  func.func @transform_0(%arg0: i32) -> (i32, i32) {
    %c0_i32 = arith.constant 0 : i32
    %c0_i32_0 = arith.constant 0 : i32
    %c0_i32_1 = arith.constant 0 : i32
    return %c0_i32, %c0_i32_0 : i32, i32
  }
  func.func @transform_1(%arg0: i32) -> (i32, i32, i32) {
    %c0_i32 = arith.constant 0 : i32
    %c0_i32_0 = arith.constant 0 : i32
    %c0_i32_1 = arith.constant 0 : i32
    return %arg0, %c0_i32, %c0_i32_0 : i32, i32, i32
  }
  func.func @transform_2(%arg0: i32) -> (i32, i32) {
    %c0_i32 = arith.constant 0 : i32
    %c0_i32_0 = arith.constant 0 : i32
    %c0_i32_1 = arith.constant 0 : i32
    return %c0_i32, %c0_i32_0 : i32, i32
  }
  func.func @transform_3(%arg0: i32) -> i32 {
    %c0_i32 = arith.constant 0 : i32
    %c0_i32_0 = arith.constant 0 : i32
    return %c0_i32 : i32
  }
}

module attributes {stable_mosaic.version = 11 : i64} {
  func.func @_fused_mlp_kernel(%arg0: i32, %arg1: memref<16x128xf32, #tpu.memory_space<vmem>>, %arg2: memref<1x128x128xbf16, #tpu.memory_space<vmem>>, %arg3: memref<16x128xf32, #tpu.memory_space<vmem>>, %arg4: memref<4xf32, #tpu.memory_space<smem>>) attributes {dimension_semantics = [#tpu.dimension_semantics<arbitrary>], iteration_bounds = array<i64: 4>, scalar_prefetch = 0 : i64, scratch_operands = 0 : i64, tpu.core_type = #tpu.core_type<tc>, window_params = [{pipeline_mode = #tpu.pipeline_mode<synchronous>, transform_indices = @transform_0, window_bounds = array<i64: 16, 128>}, {transform_indices = @transform_1, window_bounds = array<i64: 1, 128, 128>}, {pipeline_mode = #tpu.pipeline_mode<synchronous>, transform_indices = @transform_2, window_bounds = array<i64: 16, 128>}, {transform_indices = @transform_3, window_bounds = array<i64: 4>}]} {
    %c0_i32 = arith.constant 0 : i32
    %0 = arith.cmpi eq, %arg0, %c0_i32 : i32
    %1 = arith.extui %0 : i1 to i32
    %c0_i32_0 = arith.constant 0 : i32
    %2 = arith.cmpi ne, %1, %c0_i32_0 : i32
    scf.if %2 {
      %c0_12 = arith.constant 0 : index
      %c0_13 = arith.constant 0 : index
      %27 = vector.load %arg1[%c0_12, %c0_13] : memref<16x128xf32, #tpu.memory_space<vmem>>, vector<16x128xf32>
      %c0_14 = arith.constant 0 : index
      %c0_15 = arith.constant 0 : index
      %28 = vector.load %arg3[%c0_14, %c0_15] : memref<16x128xf32, #tpu.memory_space<vmem>>, vector<16x128xf32>
      tpu.vector_store %arg3[%c0_14, %c0_15], %27 {strides = array<i32>} : memref<16x128xf32, #tpu.memory_space<vmem>>, vector<16x128xf32>,
    } else {
    }
    %c0 = arith.constant 0 : index
    %c0_1 = arith.constant 0 : index
    %3 = vector.load %arg3[%c0, %c0_1] : memref<16x128xf32, #tpu.memory_space<vmem>>, vector<16x128xf32>
    %4 = arith.truncf %3 : vector<16x128xf32> to vector<16x128xbf16>
    %c0_2 = arith.constant 0 : index
    %c0_3 = arith.constant 0 : index
    %c0_4 = arith.constant 0 : index
    %5 = vector.load %arg2[%c0_2, %c0_3, %c0_4] : memref<1x128x128xbf16, #tpu.memory_space<vmem>>, vector<1x128x128xbf16>
    %6 = vector.shape_cast %5 : vector<1x128x128xbf16> to vector<128x128xbf16>
    %cst = arith.constant dense<0.000000e+00> : vector<16x128xf32>
    %7 = tpu.matmul %4, %6, %cst {dimension_numbers = #tpu.dot_dimension_numbers<[1], [0], [0], [1], [0, 0, 1, 1], [], []>} : vector<16x128xbf16>, vector<128x128xbf16>, vector<16x128xf32> -> vector<16x128xf32>
    %cst_5 = arith.constant 0.000000e+00 : f32
    %8 = vector.broadcast %cst_5 : f32 to vector<16x128xf32>
    %9 = arith.maximumf %7, %8 : vector<16x128xf32>
    %c0_6 = arith.constant 0 : index
    %c0_7 = arith.constant 0 : index
    %10 = vector.load %arg3[%c0_6, %c0_7] : memref<16x128xf32, #tpu.memory_space<vmem>>, vector<16x128xf32>
    tpu.vector_store %arg3[%c0_6, %c0_7], %9 {strides = array<i32>} : memref<16x128xf32, #tpu.memory_space<vmem>>, vector<16x128xf32>,
    %11 = vector.shape_cast %9 : vector<16x128xf32> to vector<1x16x128xf32>
    %cst_8 = arith.constant dense<0.000000e+00> : vector<1xf32>
    %12 = vector.multi_reduction <add>, %11, %cst_8 [1, 2] : vector<1x16x128xf32> to vector<1xf32>
    %13 = vector.shape_cast %12 : vector<1xf32> to vector<1x1x1xf32>
    %14 = vector.extract %13[0, 0, 0] : f32 from vector<1x1x1xf32>
    %cst_9 = arith.constant 2.048000e+03 : f32
    %15 = arith.divf %14, %cst_9 : f32
    %16 = vector.broadcast %15 : f32 to vector<16x128xf32>
    %17 = arith.subf %9, %16 : vector<16x128xf32>
    %18 = arith.mulf %17, %17 : vector<16x128xf32>
    %19 = vector.shape_cast %18 : vector<16x128xf32> to vector<1x16x128xf32>
    %cst_10 = arith.constant dense<0.000000e+00> : vector<1xf32>
    %20 = vector.multi_reduction <add>, %19, %cst_10 [1, 2] : vector<1x16x128xf32> to vector<1xf32>
    %21 = vector.shape_cast %20 : vector<1xf32> to vector<1x1x1xf32>
    %22 = vector.extract %21[0, 0, 0] : f32 from vector<1x1x1xf32>
    %cst_11 = arith.constant 2.047000e+03 : f32
    %23 = arith.divf %22, %cst_11 : f32
    %24 = math.sqrt %23 : f32
    %25 = arith.index_cast %arg0 : i32 to index
    %26 = memref.load %arg4[%25] : memref<4xf32, #tpu.memory_space<smem>>
    memref.store %24, %arg4[%25] : memref<4xf32, #tpu.memory_space<smem>>
    return
  }
  func.func @transform_0(%arg0: i32) -> (i32, i32) {
    %c0_i32 = arith.constant 0 : i32
    %c0_i32_0 = arith.constant 0 : i32
    %c0_i32_1 = arith.constant 0 : i32
    return %c0_i32, %c0_i32_0 : i32, i32
  }
  func.func @transform_1(%arg0: i32) -> (i32, i32, i32) {
    %c0_i32 = arith.constant 0 : i32
    %c0_i32_0 = arith.constant 0 : i32
    %c0_i32_1 = arith.constant 0 : i32
    return %arg0, %c0_i32, %c0_i32_0 : i32, i32, i32
  }
  func.func @transform_2(%arg0: i32) -> (i32, i32) {
    %c0_i32 = arith.constant 0 : i32
    %c0_i32_0 = arith.constant 0 : i32
    %c0_i32_1 = arith.constant 0 : i32
    return %c0_i32, %c0_i32_0 : i32, i32
  }
  func.func @transform_3(%arg0: i32) -> i32 {
    %c0_i32 = arith.constant 0 : i32
    %c0_i32_0 = arith.constant 0 : i32
    return %c0_i32 : i32
  }
}

</mosaic_0001>

<llo_original>
// kernel: tpu_custom_call.1
$region0: #{tpu_custom_call.1}
  #allocation0 [shape = 'u32[]', space=smem, size = 0x4, offset = 0x4, fixed_abs, tag = 'smem constant byte address 0x4 - core index']
  #allocation1 [shape = 'u32[144,128]{1,0:T(1,128)}', space=vmem, size = 0x12000, scoped, tag = 'internal scratch']
  %s0 = inlined_call_operand.hbm [shape: f32[16,128], index: 0, kind: input, shape index: {}]
  %s1 = inlined_call_operand.hbm [shape: bf16[4,128,128], index: 1, kind: input, shape index: {}]
  %s2 = inlined_call_operand.hbm [shape: f32[16,128], index: 2, kind: output, shape index: {0}]
  %s3 = inlined_call_operand.hbm [shape: f32[4], index: 3, kind: output, shape index: {1}]
  %4 = xla_tuple %s2, %s3
  %s5 = sld [smem:[#allocation0]]
  $region61: #{tpu_custom_call.1} parent=0
    _
  %s7 = ssub.s32 1, %s5
  %s8 = scalar_select 0, %s7, %s5
  $region1: #{tpu_custom_call.1} parent=0
    #allocation2 [shape = 'u8[8192]{0}', space=vmem, size = 0x2000, scoped, tag = 'input window, operand 0, single buffered']
    #allocation3 [shape = 's32[2]{0}', space=sflag, size = 0x8, scoped, tag = 'scoped memory for tpu_custom_call.1']
    #allocation4 [shape = 's32[2]{0}', space=sflag, size = 0x8, scoped, tag = 'scoped memory for tpu_custom_call.1']
    #allocation5 [shape = 's32[2]{0}', space=sflag, size = 0x8, scoped, tag = 'scoped memory for tpu_custom_call.1']
    #allocation6 [shape = 'u8[65536]{0}', space=vmem, size = 0x10000, scoped, tag = 'input window, operand 1']
    #allocation7 [shape = 's32[2]{0}', space=sflag, size = 0x8, scoped, tag = 'scoped memory for tpu_custom_call.1']
    #allocation8 [shape = 'u8[8192]{0}', space=vmem, size = 0x2000, scoped, tag = 'output window, operand 0, single buffered']
    #allocation9 [shape = 'u8[512]{0}', space=smem, size = 0x200, scoped, tag = 'output window, operand 1, single buffered']
    %9 = vsyncpa [#allocation3], 0
    %10 = vsyncpa [#allocation7], 0
    %s11 = scalar_lea.sflag [#allocation7], 1
    %12 = vsyncpa %s11, 0
    %13 = vsyncpa [#allocation4], 0
    %14 = vsyncpa [#allocation5], 0
    loop: start=0, step=1, limit=6
    $region2: #{tpu_custom_call.1} parent=1 // loop_pre_header
      _
    $region3: #{tpu_custom_call.1} parent=1 // loop_header
      %s16 = sphi 0, %s20
      %p17 = scmp.ge.s32.totalorder %s16, 6
      %s24 = sphi 0, %s24
      %s26 = sphi 0, %s24
      %s27 = sphi 0, %s26
      %s41 = sphi 0, %s27
      %s47 = sphi 0, %s49
      %s50 = sphi 0, %s47
      %s51 = sphi 0, %s50
      %s67 = sphi 0, %s51
      %s71 = sphi 0, %s71
      %s73 = sphi 0, %s71
      %s74 = sphi 0, %s73
      %s88 = sphi 0, %s74
      %s92 = sphi 0, %s92
      %s94 = sphi 0, %s92
      %s95 = sphi 0, %s94
      %s109 = sphi 0, %s95
    $region4: #{tpu_custom_call.1} parent=1 // loop_header_branch
      %19 = sbr.rel (%p17) target = $region8
    $region5: #{tpu_custom_call.1} parent=1 // loop_body
      %s21 = ssub.s32 %s16, 1
      %s22 = ssub.s32 %s16, 2
      %s23 = sadd.s32 %s16, 1
      %s25 = sadd.s32 %s24, 1
      %p28 = scmp.eq.s32.totalorder %s16, 3
      %p29 = scmp.ne.s32.totalorder %s24, %s26
      %p30 = scmp.eq.s32.totalorder %s16, 0
      %p31 = por %p29, %p30
      %p32 = scmp.ne.s32.totalorder %s24, %s26
      %p33 = scmp.eq.s32.totalorder %s21, 3
      %p34 = por %p32, %p33
      %p35 = scmp.ne.s32.totalorder %s26, %s27
      %p36 = scmp.eq.s32.totalorder %s21, 0
      %p37 = por %p35, %p36
      %p38 = scmp.ne.s32.totalorder %s26, %s27
      %p39 = scmp.eq.s32.totalorder %s22, 3
      %p40 = por %p38, %p39
      %p42 = scmp.ne.s32.totalorder %s27, %s41
      %p43 = scmp.eq.s32.totalorder %s22, 0
      %p44 = por %p42, %p43
      %s45 = ssub.s32 %s16, %s23
      %p46 = scmp.eq.s32.totalorder %s45, 0
      %s48 = sadd.s32 %s47, 1
      %s49 = scalar_select %p46, %s47, %s48
      %p52 = pneg %p46
      %p53 = scmp.eq.s32.totalorder %s16, 3
      %p54 = por %p52, %p53
      %p55 = scmp.ne.s32.totalorder %s47, %s50
      %p56 = scmp.eq.s32.totalorder %s16, 0
      %p57 = por %p55, %p56
      %p58 = scmp.ne.s32.totalorder %s47, %s50
      %p59 = scmp.eq.s32.totalorder %s21, 3
      %p60 = por %p58, %p59
      %p61 = scmp.ne.s32.totalorder %s50, %s51
      %p62 = scmp.eq.s32.totalorder %s21, 0
      %p63 = por %p61, %p62
      %p64 = scmp.ne.s32.totalorder %s50, %s51
      %p65 = scmp.eq.s32.totalorder %s22, 3
      %p66 = por %p64, %p65
      %p68 = scmp.ne.s32.totalorder %s51, %s67
      %p69 = scmp.eq.s32.totalorder %s22, 0
      %p70 = por %p68, %p69
      %s72 = sadd.s32 %s71, 1
      %p75 = scmp.eq.s32.totalorder %s16, 3
      %p76 = scmp.ne.s32.totalorder %s71, %s73
      %p77 = scmp.eq.s32.totalorder %s16, 0
      %p78 = por %p76, %p77
      %p79 = scmp.ne.s32.totalorder %s71, %s73
      %p80 = scmp.eq.s32.totalorder %s21, 3
      %p81 = por %p79, %p80
      %p82 = scmp.ne.s32.totalorder %s73, %s74
      %p83 = scmp.eq.s32.totalorder %s21, 0
      %p84 = por %p82, %p83
      %p85 = scmp.ne.s32.totalorder %s73, %s74
      %p86 = scmp.eq.s32.totalorder %s22, 3
      %p87 = por %p85, %p86
      %p89 = scmp.ne.s32.totalorder %s74, %s88
      %p90 = scmp.eq.s32.totalorder %s22, 0
      %p91 = por %p89, %p90
      %s93 = sadd.s32 %s92, 1
      %p96 = scmp.eq.s32.totalorder %s16, 3
      %p97 = scmp.ne.s32.totalorder %s92, %s94
      %p98 = scmp.eq.s32.totalorder %s16, 0
      %p99 = por %p97, %p98
      %p100 = scmp.ne.s32.totalorder %s92, %s94
      %p101 = scmp.eq.s32.totalorder %s21, 3
      %p102 = por %p100, %p101
      %p103 = scmp.ne.s32.totalorder %s94, %s95
      %p104 = scmp.eq.s32.totalorder %s21, 0
      %p105 = por %p103, %p104
      %p106 = scmp.ne.s32.totalorder %s94, %s95
      %p107 = scmp.eq.s32.totalorder %s22, 3
      %p108 = por %p106, %p107
      %p110 = scmp.ne.s32.totalorder %s95, %s109
      %p111 = scmp.eq.s32.totalorder %s22, 0
      %p112 = por %p110, %p111
      %p113 = scmp.le.s32.totalorder 1, %s16
      %p114 = scmp.lt.s32.totalorder %s16, 5
      %p115 = pnand %p113, %p114
      %p116 = pneg %p115
      // Predicated region
      $region9: #{tpu_custom_call.1} parent=5 // pred_check
        _
      $region10: #{tpu_custom_call.1} parent=5 // pred_check_branch
        %118 = sbr.rel (%p115) target = $region12
      $region11: #{tpu_custom_call.1} parent=5 // pred_region
        %s119 = ssub.s32 %s16, 1
        // Predicated region
        $region13: #{tpu_custom_call.1} parent=11 // pred_check
          %p120 = pneg %p37
        $region14: #{tpu_custom_call.1} parent=11 // pred_check_branch
          %122 = sbr.rel (%p120) target = $region16
        $region15: #{tpu_custom_call.1} parent=11 // pred_region
          %s124 = ssub.s32 256, 256
          %125 = vsyncadd [#allocation3], %s124
          %s126 = sshll.u32 [#allocation2], 4
          %s127 = int_to_ptr.vmem [resolvable:$true] %s126
          %132 = dma.hbm_to_vmem [thread:$0]  %s0, 256, %s127, [#allocation3], 128, 128, 8
        $region16: #{tpu_custom_call.1} parent=11 // pred_fallthru
          _
      $region12: #{tpu_custom_call.1} parent=5 // pred_fallthru
        _
      %p133 = scmp.lt.s32.totalorder %s16, 4
      // Predicated region
      $region17: #{tpu_custom_call.1} parent=5 // pred_check
        %p134 = pneg %p133
      $region18: #{tpu_custom_call.1} parent=5 // pred_check_branch
        %136 = sbr.rel (%p134) target = $region20
      $region19: #{tpu_custom_call.1} parent=5 // pred_region
        // Predicated region
        $region21: #{tpu_custom_call.1} parent=19 // pred_check
          %p137 = pneg %p57
        $region22: #{tpu_custom_call.1} parent=19 // pred_check_branch
          %139 = sbr.rel (%p137) target = $region24
        $region23: #{tpu_custom_call.1} parent=19 // pred_region
          %s140 = sand.u32 %s47, 1
          %s141 = scalar_lea.sflag [#allocation7], %s140
          %s142 = sand.u32 %s47, 1
          %s143 = smul.addr %s142, 64
          %s144 = scalar_lea.vmem [#allocation6], %s143
          %s146 = ssub.s32 1024, 1024
          %147 = vsyncadd %s141, %s146
          %s148 = smul.addr %s16, 16
          %s149 = smul.addr %s148, 64
          %s150 = scalar_lea.hbm %s1, %s149
          %s151 = sshll.u32 %s144, 4
          %s152 = int_to_ptr.vmem [resolvable:$true] %s151
          %157 = dma.hbm_to_vmem [thread:$0]  %s150, 1024, %s152, %s141, 64, 64, 4
        $region24: #{tpu_custom_call.1} parent=19 // pred_fallthru
          _
      $region20: #{tpu_custom_call.1} parent=5 // pred_fallthru
        _
      %p158 = scmp.le.s32.totalorder 1, %s16
      %p159 = scmp.lt.s32.totalorder %s16, 5
      %p160 = pnand %p158, %p159
      %p161 = pneg %p160
      // Predicated region
      $region25: #{tpu_custom_call.1} parent=5 // pred_check
        _
      $region26: #{tpu_custom_call.1} parent=5 // pred_check_branch
        %163 = sbr.rel (%p160) target = $region28
      $region27: #{tpu_custom_call.1} parent=5 // pred_region
        %s164 = ssub.s32 %s16, 1
        // Predicated region
        $region29: #{tpu_custom_call.1} parent=27 // pred_check
          %p165 = pneg %p37
        $region30: #{tpu_custom_call.1} parent=27 // pred_check_branch
          %167 = sbr.rel (%p165) target = $region32
        $region31: #{tpu_custom_call.1} parent=27 // pred_region
          %168 = dma.done [#allocation3], 256
        $region32: #{tpu_custom_call.1} parent=27 // pred_fallthru
          _
        %s169 = sand.u32 %s50, 1
        %s170 = scalar_lea.sflag [#allocation7], %s169
        %s171 = sand.u32 %s50, 1
        %s172 = smul.addr %s171, 64
        %s173 = scalar_lea.vmem [#allocation6], %s172
        // Predicated region
        $region33: #{tpu_custom_call.1} parent=27 // pred_check
          %p174 = pneg %p63
        $region34: #{tpu_custom_call.1} parent=27 // pred_check_branch
          %176 = sbr.rel (%p174) target = $region36
        $region35: #{tpu_custom_call.1} parent=27 // pred_region
          %177 = dma.done %s170, 1024
        $region36: #{tpu_custom_call.1} parent=27 // pred_fallthru
          _
        %p178 = pneg %p37
        %p179 = pneg %p34
        %s180 = sand.u32 %s50, 1
        %s181 = scalar_lea.sflag [#allocation7], %s180
        %s182 = sand.u32 %s50, 1
        %s183 = smul.addr %s182, 64
        %s184 = scalar_lea.vmem [#allocation6], %s183
        %p185 = pneg %p63
        %p186 = pneg %p60
        %p187 = pneg %p84
        %p188 = pneg %p81
        %p189 = pneg %p105
        %p190 = pneg %p102
        %p192 = scmp.eq.s32.totalorder %s21, 0
        // Predicated region
        $region37: #{tpu_custom_call.1} parent=27 // pred_check
          %p193 = pneg %p192
        $region38: #{tpu_custom_call.1} parent=27 // pred_check_branch
          %195 = sbr.rel (%p193) target = $region40
        $region39: #{tpu_custom_call.1} parent=27 // pred_region
          %v196 = vld [vmem:[#allocation2] sm:$0xff]
          %v197 = vld [vmem:[#allocation2 + $0x8] sm:$0xff]
          %198 = vst [vmem:[#allocation8] sm:$0xff] %v196
          %199 = vst [vmem:[#allocation8 + $0x8] sm:$0xff] %v197
        $region40: #{tpu_custom_call.1} parent=27 // pred_fallthru
          _
        %v200 = vld [vmem:[#allocation8] sm:$0xff]
        %v201 = vld [vmem:[#allocation8 + $0x8] sm:$0xff]
        %v202 = vpack.c.bf16 %v201, %v200
        %v203 = vld [vmem:[%s173] sm:$0xf]
        %v204 = vld [vmem:[%s173 + $0x4] sm:$0xf]
        %v205 = vld [vmem:[%s173 + $0x8] sm:$0xf]
        %v206 = vld [vmem:[%s173 + $0xc] sm:$0xf]
        %v207 = vld [vmem:[%s173 + $0x10] sm:$0xf]
        %v208 = vld [vmem:[%s173 + $0x14] sm:$0xf]
        %v209 = vld [vmem:[%s173 + $0x18] sm:$0xf]
        %v210 = vld [vmem:[%s173 + $0x1c] sm:$0xf]
        %v211 = vld [vmem:[%s173 + $0x20] sm:$0xf]
        %v212 = vld [vmem:[%s173 + $0x24] sm:$0xf]
        %v213 = vld [vmem:[%s173 + $0x28] sm:$0xf]
        %v214 = vld [vmem:[%s173 + $0x2c] sm:$0xf]
        %v215 = vld [vmem:[%s173 + $0x30] sm:$0xf]
        %v216 = vld [vmem:[%s173 + $0x34] sm:$0xf]
        %v217 = vld [vmem:[%s173 + $0x38] sm:$0xf]
        %v218 = vld [vmem:[%s173 + $0x3c] sm:$0xf]
        %v235 = vunpack.c.l.b16 %v203
        %v236 = vunpack.c.l.b16 %v204
        %v237 = vunpack.c.l.b16 %v205
        %v238 = vunpack.c.l.b16 %v206
        %v239 = vunpack.c.l.b16 %v207
        %v240 = vunpack.c.l.b16 %v208
        %v241 = vunpack.c.l.b16 %v209
        %v242 = vunpack.c.l.b16 %v210
        %v243 = vunpack.c.l.b16 %v211
        %v244 = vunpack.c.l.b16 %v212
        %v245 = vunpack.c.l.b16 %v213
        %v246 = vunpack.c.l.b16 %v214
        %v247 = vunpack.c.l.b16 %v215
        %v248 = vunpack.c.l.b16 %v216
        %v249 = vunpack.c.l.b16 %v217
        %v250 = vunpack.c.l.b16 %v218
        %v251 = vpack.c.b16 %v236, %v235
        %v252 = vpack.c.b16 %v238, %v237
        %v253 = vpack.c.b16 %v240, %v239
        %v254 = vpack.c.b16 %v242, %v241
        %v255 = vpack.c.b16 %v244, %v243
        %v256 = vpack.c.b16 %v246, %v245
        %v257 = vpack.c.b16 %v248, %v247
        %v258 = vpack.c.b16 %v250, %v249
        %267 = vmatprep.subr.bf16.mxu0 0
        %268 = vmatpush1.bf16.msra.mxu0 %v251
        %269 = vmatprep.subr.bf16.mxu0 0
        %270 = vmatpush1.bf16.msra.mxu0 %v252
        %271 = vmatprep.subr.bf16.mxu0 0
        %272 = vmatpush1.bf16.msra.mxu0 %v253
        %273 = vmatprep.subr.bf16.mxu0 0
        %274 = vmatpush1.bf16.msra.mxu0 %v254
        %275 = vmatprep.subr.bf16.mxu0 0
        %276 = vmatpush1.bf16.msra.mxu0 %v255
        %277 = vmatprep.subr.bf16.mxu0 0
        %278 = vmatpush1.bf16.msra.mxu0 %v256
        %279 = vmatprep.subr.bf16.mxu0 0
        %280 = vmatpush1.bf16.msra.mxu0 %v257
        %281 = vmatprep.subr.bf16.mxu0 0
        %282 = vmatpush1.bf16.msra.mxu0 %v258
        %283 = vmatprep.subr.bf16.mxu0 0
        %284 = vmatpush1.bf16.msra.mxu0 0
        %285 = vmatprep.subr.bf16.mxu0 0
        %286 = vmatpush1.bf16.msra.mxu0 0
        %287 = vmatprep.subr.bf16.mxu0 0
        %288 = vmatpush1.bf16.msra.mxu0 0
        %289 = vmatprep.subr.bf16.mxu0 0
        %290 = vmatpush1.bf16.msra.mxu0 0
        %291 = vmatprep.subr.bf16.mxu0 0
        %292 = vmatpush1.bf16.msra.mxu0 0
        %293 = vmatprep.subr.bf16.mxu0 0
        %294 = vmatpush1.bf16.msra.mxu0 0
        %295 = vmatprep.subr.bf16.mxu0 0
        %296 = vmatpush1.bf16.msra.mxu0 0
        %297 = vmatprep.subr.bf16.mxu0 0
        %298 = vmatpush1.bf16.msra.mxu0 0
        %299 = vmatprep.mubr.bf16.mxu0 0
        %300 = vmatmul.mubr.bf16.gmra.mrb[0].mxu0 %v202
        %v301 = vpop.f32.mrb[0].mxu0
        %v302 = vadd.f32 0.0, %v301
        %v303 = vpop.f32.mrb[0].mxu0
        %v304 = vpop.f32.mrb[0].mxu0
        %v305 = vadd.f32 0.0, %v304
        %v306 = vpop.f32.mrb[0].mxu0
        %307 = vdwg.mxu0
        %v308 = vmax.f32 %v302, 0.0
        %v309 = vmax.f32 %v305, 0.0
        %310 = vst [vmem:[#allocation8] sm:$0xff] %v308
        %311 = vst [vmem:[#allocation8 + $0x8] sm:$0xff] %v309
        %v312 = vadd.f32 %v308, %v309
        %313 = vadd.xlane.f32.xlu0 %v312
        %v314 = vpop.xlane.xlu0 %313
        %v315 = vrot.slane %v314, 4
        %v316 = vadd.f32 %v314, %v315
        %v317 = vrot.slane %v316, 2
        %v318 = vadd.f32 %v316, %v317
        %v319 = vrot.slane %v318, 1
        %v320 = vadd.f32 %v318, %v319
        %s321 = vtos %v320
        %v322 = vrcp.pop 2048.0
        %s323 = vtos %v322
        %s324 = smul.f32 %s321, %s323
        %v325 = vstv %s324
        %v326 = vsub.f32 %v308, %v325
        %v327 = vsub.f32 %v309, %v325
        %v328 = vmul.f32 %v326, %v326
        %v329 = vmul.f32 %v327, %v327
        %v330 = vadd.f32 %v328, %v329
        %331 = vadd.xlane.f32.xlu0 %v330
        %v332 = vpop.xlane.xlu0 %331
        %v333 = vrot.slane %v332, 4
        %v334 = vadd.f32 %v332, %v333
        %v335 = vrot.slane %v334, 2
        %v336 = vadd.f32 %v334, %v335
        %v337 = vrot.slane %v336, 1
        %v338 = vadd.f32 %v336, %v337
        %s339 = vtos %v338
        %v340 = vrcp.pop 2047.0
        %s341 = vtos %v340
        %s342 = smul.f32 %s339, %s341
        %v343 = vstv %s342
        %v344 = vrsqrt.pop %v343
        %v345 = vmul.f32 %v343, %v344
        %vm346 = vcmp.eq.f32.partialorder %v343, inf
        %v347 = vsel %vm346, %v343, %v345
        %vm348 = vcmp.eq.f32.partialorder %v343, 0.0
        %v349 = vand.u32 %v343, 2147483648
        %v350 = vsel %vm348, %v349, %v347
        %s351 = vtos %v350
        %s352 = scalar_lea.smem [#allocation9], %s21
        %353 = sst [smem:[%s352]] %s351
        // Predicated region
        $region41: #{tpu_custom_call.1} parent=27 // pred_check
          %p354 = pneg %p81
        $region42: #{tpu_custom_call.1} parent=27 // pred_check_branch
          %356 = sbr.rel (%p354) target = $region44
        $region43: #{tpu_custom_call.1} parent=27 // pred_region
          %s358 = ssub.s32 256, 256
          %359 = vsyncadd [#allocation4], %s358
          %s360 = sshll.u32 [#allocation8], 4
          %s361 = int_to_ptr.vmem [resolvable:$true] %s360
          %366 = dma.vmem_to_hbm [thread:$0]  %s361, 256, %s2, [#allocation4], 128, 128, 8
        $region44: #{tpu_custom_call.1} parent=27 // pred_fallthru
          _
        // Predicated region
        $region45: #{tpu_custom_call.1} parent=27 // pred_check
          %p367 = pneg %p102
        $region46: #{tpu_custom_call.1} parent=27 // pred_check_branch
          %369 = sbr.rel (%p367) target = $region48
        $region47: #{tpu_custom_call.1} parent=27 // pred_region
          %s371 = ssub.s32 16, 16
          %372 = vsyncadd [#allocation5], %s371
          %375 = dma.smem_to_hbm [#allocation9], 16, %s3, [#allocation5]
        $region48: #{tpu_custom_call.1} parent=27 // pred_fallthru
          _
        // Predicated region
        $region49: #{tpu_custom_call.1} parent=27 // pred_check
          %p376 = pneg %p81
        $region50: #{tpu_custom_call.1} parent=27 // pred_check_branch
          %378 = sbr.rel (%p376) target = $region52
        $region51: #{tpu_custom_call.1} parent=27 // pred_region
          %379 = dma.done [#allocation4], 256
        $region52: #{tpu_custom_call.1} parent=27 // pred_fallthru
          _
        // Predicated region
        $region53: #{tpu_custom_call.1} parent=27 // pred_check
          %p380 = pneg %p102
        $region54: #{tpu_custom_call.1} parent=27 // pred_check_branch
          %382 = sbr.rel (%p380) target = $region56
        $region55: #{tpu_custom_call.1} parent=27 // pred_region
          %383 = dma.done [#allocation5], 16
        $region56: #{tpu_custom_call.1} parent=27 // pred_fallthru
          _
        %384 = sfence
      $region28: #{tpu_custom_call.1} parent=5 // pred_fallthru
        _
      %p385 = scmp.le.s32.totalorder 2, %s16
      // Predicated region
      $region57: #{tpu_custom_call.1} parent=5 // pred_check
        %p386 = pneg %p385
      $region58: #{tpu_custom_call.1} parent=5 // pred_check_branch
        %388 = sbr.rel (%p386) target = $region60
      $region59: #{tpu_custom_call.1} parent=5 // pred_region
        %s389 = ssub.s32 %s16, 2
      $region60: #{tpu_custom_call.1} parent=5 // pred_fallthru
        _
    $region6: #{tpu_custom_call.1} parent=1 // loop_footer
      %s20 = sadd.s32 1, %s16
    $region7: #{tpu_custom_call.1} parent=1 // loop_footer_branch
      %15 = sbr.rel target = $region3
    $region8: #{tpu_custom_call.1} parent=1 // loop_exit
      _
    %390 = vsyncpa [#allocation3], 1
    %s391 = scalar_lea.sflag [#allocation3], 1
    %392 = vsyncpa %s391, 1
    %393 = vsyncpa [#allocation7], 1
    %s394 = scalar_lea.sflag [#allocation7], 1
    %395 = vsyncpa %s394, 1
    %396 = vsyncpa [#allocation4], 1
    %s397 = scalar_lea.sflag [#allocation4], 1
    %398 = vsyncpa %s397, 1
    %399 = vsyncpa [#allocation5], 1
    %s400 = scalar_lea.sflag [#allocation5], 1
    %401 = vsyncpa %s400, 1

// kernel: tpu_custom_call.1
$region0: #{tpu_custom_call.1}
  #allocation0 [shape = 'u32[]', space=smem, size = 0x4, offset = 0x4, fixed_abs, tag = 'smem constant byte address 0x4 - core index']
  #allocation1 [shape = 'u32[144,128]{1,0:T(1,128)}', space=vmem, size = 0x12000, scoped, tag = 'internal scratch']
  %s0 = inlined_call_operand.hbm [shape: f32[16,128], index: 0, kind: input, shape index: {}]
  %s1 = inlined_call_operand.hbm [shape: bf16[4,128,128], index: 1, kind: input, shape index: {}]
  %s2 = inlined_call_operand.hbm [shape: f32[16,128], index: 2, kind: output, shape index: {0}]
  %s3 = inlined_call_operand.hbm [shape: f32[4], index: 3, kind: output, shape index: {1}]
  %4 = xla_tuple %s2, %s3
  %s5 = sld [smem:[#allocation0]]
  $region61: #{tpu_custom_call.1} parent=0
    _
  %s7 = ssub.s32 1, %s5
  %s8 = scalar_select 0, %s7, %s5
  $region1: #{tpu_custom_call.1} parent=0
    #allocation2 [shape = 'u8[8192]{0}', space=vmem, size = 0x2000, scoped, tag = 'input window, operand 0, single buffered']
    #allocation3 [shape = 's32[2]{0}', space=sflag, size = 0x8, scoped, tag = 'scoped memory for tpu_custom_call.1']
    #allocation4 [shape = 's32[2]{0}', space=sflag, size = 0x8, scoped, tag = 'scoped memory for tpu_custom_call.1']
    #allocation5 [shape = 's32[2]{0}', space=sflag, size = 0x8, scoped, tag = 'scoped memory for tpu_custom_call.1']
    #allocation6 [shape = 'u8[65536]{0}', space=vmem, size = 0x10000, scoped, tag = 'input window, operand 1']
    #allocation7 [shape = 's32[2]{0}', space=sflag, size = 0x8, scoped, tag = 'scoped memory for tpu_custom_call.1']
    #allocation8 [shape = 'u8[8192]{0}', space=vmem, size = 0x2000, scoped, tag = 'output window, operand 0, single buffered']
    #allocation9 [shape = 'u8[512]{0}', space=smem, size = 0x200, scoped, tag = 'output window, operand 1, single buffered']
    %9 = vsyncpa [#allocation3], 0
    %10 = vsyncpa [#allocation7], 0
    %s11 = scalar_lea.sflag [#allocation7], 1
    %12 = vsyncpa %s11, 0
    %13 = vsyncpa [#allocation4], 0
    %14 = vsyncpa [#allocation5], 0
    loop: start=0, step=1, limit=6
    $region2: #{tpu_custom_call.1} parent=1 // loop_pre_header
      _
    $region3: #{tpu_custom_call.1} parent=1 // loop_header
      %s16 = sphi 0, %s20
      %p17 = scmp.ge.s32.totalorder %s16, 6
      %s24 = sphi 0, %s24
      %s26 = sphi 0, %s24
      %s27 = sphi 0, %s26
      %s41 = sphi 0, %s27
      %s47 = sphi 0, %s49
      %s50 = sphi 0, %s47
      %s51 = sphi 0, %s50
      %s67 = sphi 0, %s51
      %s71 = sphi 0, %s71
      %s73 = sphi 0, %s71
      %s74 = sphi 0, %s73
      %s88 = sphi 0, %s74
      %s92 = sphi 0, %s92
      %s94 = sphi 0, %s92
      %s95 = sphi 0, %s94
      %s109 = sphi 0, %s95
    $region4: #{tpu_custom_call.1} parent=1 // loop_header_branch
      %19 = sbr.rel (%p17) target = $region8
    $region5: #{tpu_custom_call.1} parent=1 // loop_body
      %s21 = ssub.s32 %s16, 1
      %s22 = ssub.s32 %s16, 2
      %s23 = sadd.s32 %s16, 1
      %s25 = sadd.s32 %s24, 1
      %p28 = scmp.eq.s32.totalorder %s16, 3
      %p29 = scmp.ne.s32.totalorder %s24, %s26
      %p30 = scmp.eq.s32.totalorder %s16, 0
      %p31 = por %p29, %p30
      %p32 = scmp.ne.s32.totalorder %s24, %s26
      %p33 = scmp.eq.s32.totalorder %s21, 3
      %p34 = por %p32, %p33
      %p35 = scmp.ne.s32.totalorder %s26, %s27
      %p36 = scmp.eq.s32.totalorder %s21, 0
      %p37 = por %p35, %p36
      %p38 = scmp.ne.s32.totalorder %s26, %s27
      %p39 = scmp.eq.s32.totalorder %s22, 3
      %p40 = por %p38, %p39
      %p42 = scmp.ne.s32.totalorder %s27, %s41
      %p43 = scmp.eq.s32.totalorder %s22, 0
      %p44 = por %p42, %p43
      %s45 = ssub.s32 %s16, %s23
      %p46 = scmp.eq.s32.totalorder %s45, 0
      %s48 = sadd.s32 %s47, 1
      %s49 = scalar_select %p46, %s47, %s48
      %p52 = pneg %p46
      %p53 = scmp.eq.s32.totalorder %s16, 3
      %p54 = por %p52, %p53
      %p55 = scmp.ne.s32.totalorder %s47, %s50
      %p56 = scmp.eq.s32.totalorder %s16, 0
      %p57 = por %p55, %p56
      %p58 = scmp.ne.s32.totalorder %s47, %s50
      %p59 = scmp.eq.s32.totalorder %s21, 3
      %p60 = por %p58, %p59
      %p61 = scmp.ne.s32.totalorder %s50, %s51
      %p62 = scmp.eq.s32.totalorder %s21, 0
      %p63 = por %p61, %p62
      %p64 = scmp.ne.s32.totalorder %s50, %s51
      %p65 = scmp.eq.s32.totalorder %s22, 3
      %p66 = por %p64, %p65
      %p68 = scmp.ne.s32.totalorder %s51, %s67
      %p69 = scmp.eq.s32.totalorder %s22, 0
      %p70 = por %p68, %p69
      %s72 = sadd.s32 %s71, 1
      %p75 = scmp.eq.s32.totalorder %s16, 3
      %p76 = scmp.ne.s32.totalorder %s71, %s73
      %p77 = scmp.eq.s32.totalorder %s16, 0
      %p78 = por %p76, %p77
      %p79 = scmp.ne.s32.totalorder %s71, %s73
      %p80 = scmp.eq.s32.totalorder %s21, 3
      %p81 = por %p79, %p80
      %p82 = scmp.ne.s32.totalorder %s73, %s74
      %p83 = scmp.eq.s32.totalorder %s21, 0
      %p84 = por %p82, %p83
      %p85 = scmp.ne.s32.totalorder %s73, %s74
      %p86 = scmp.eq.s32.totalorder %s22, 3
      %p87 = por %p85, %p86
      %p89 = scmp.ne.s32.totalorder %s74, %s88
      %p90 = scmp.eq.s32.totalorder %s22, 0
      %p91 = por %p89, %p90
      %s93 = sadd.s32 %s92, 1
      %p96 = scmp.eq.s32.totalorder %s16, 3
      %p97 = scmp.ne.s32.totalorder %s92, %s94
      %p98 = scmp.eq.s32.totalorder %s16, 0
      %p99 = por %p97, %p98
      %p100 = scmp.ne.s32.totalorder %s92, %s94
      %p101 = scmp.eq.s32.totalorder %s21, 3
      %p102 = por %p100, %p101
      %p103 = scmp.ne.s32.totalorder %s94, %s95
      %p104 = scmp.eq.s32.totalorder %s21, 0
      %p105 = por %p103, %p104
      %p106 = scmp.ne.s32.totalorder %s94, %s95
      %p107 = scmp.eq.s32.totalorder %s22, 3
      %p108 = por %p106, %p107
      %p110 = scmp.ne.s32.totalorder %s95, %s109
      %p111 = scmp.eq.s32.totalorder %s22, 0
      %p112 = por %p110, %p111
      %p113 = scmp.le.s32.totalorder 1, %s16
      %p114 = scmp.lt.s32.totalorder %s16, 5
      %p115 = pnand %p113, %p114
      %p116 = pneg %p115
      // Predicated region
      $region9: #{tpu_custom_call.1} parent=5 // pred_check
        _
      $region10: #{tpu_custom_call.1} parent=5 // pred_check_branch
        %118 = sbr.rel (%p115) target = $region12
      $region11: #{tpu_custom_call.1} parent=5 // pred_region
        %s119 = ssub.s32 %s16, 1
        // Predicated region
        $region13: #{tpu_custom_call.1} parent=11 // pred_check
          %p120 = pneg %p37
        $region14: #{tpu_custom_call.1} parent=11 // pred_check_branch
          %122 = sbr.rel (%p120) target = $region16
        $region15: #{tpu_custom_call.1} parent=11 // pred_region
          %s124 = ssub.s32 256, 256
          %125 = vsyncadd [#allocation3], %s124
          %s126 = sshll.u32 [#allocation2], 4
          %s127 = int_to_ptr.vmem [resolvable:$true] %s126
          %132 = dma.hbm_to_vmem [thread:$0]  %s0, 256, %s127, [#allocation3], 128, 128, 8
        $region16: #{tpu_custom_call.1} parent=11 // pred_fallthru
          _
      $region12: #{tpu_custom_call.1} parent=5 // pred_fallthru
        _
      %p133 = scmp.lt.s32.totalorder %s16, 4
      // Predicated region
      $region17: #{tpu_custom_call.1} parent=5 // pred_check
        %p134 = pneg %p133
      $region18: #{tpu_custom_call.1} parent=5 // pred_check_branch
        %136 = sbr.rel (%p134) target = $region20
      $region19: #{tpu_custom_call.1} parent=5 // pred_region
        // Predicated region
        $region21: #{tpu_custom_call.1} parent=19 // pred_check
          %p137 = pneg %p57
        $region22: #{tpu_custom_call.1} parent=19 // pred_check_branch
          %139 = sbr.rel (%p137) target = $region24
        $region23: #{tpu_custom_call.1} parent=19 // pred_region
          %s140 = sand.u32 %s47, 1
          %s141 = scalar_lea.sflag [#allocation7], %s140
          %s142 = sand.u32 %s47, 1
          %s143 = smul.addr %s142, 64
          %s144 = scalar_lea.vmem [#allocation6], %s143
          %s146 = ssub.s32 1024, 1024
          %147 = vsyncadd %s141, %s146
          %s148 = smul.addr %s16, 16
          %s149 = smul.addr %s148, 64
          %s150 = scalar_lea.hbm %s1, %s149
          %s151 = sshll.u32 %s144, 4
          %s152 = int_to_ptr.vmem [resolvable:$true] %s151
          %157 = dma.hbm_to_vmem [thread:$0]  %s150, 1024, %s152, %s141, 64, 64, 4
        $region24: #{tpu_custom_call.1} parent=19 // pred_fallthru
          _
      $region20: #{tpu_custom_call.1} parent=5 // pred_fallthru
        _
      %p158 = scmp.le.s32.totalorder 1, %s16
      %p159 = scmp.lt.s32.totalorder %s16, 5
      %p160 = pnand %p158, %p159
      %p161 = pneg %p160
      // Predicated region
      $region25: #{tpu_custom_call.1} parent=5 // pred_check
        _
      $region26: #{tpu_custom_call.1} parent=5 // pred_check_branch
        %163 = sbr.rel (%p160) target = $region28
      $region27: #{tpu_custom_call.1} parent=5 // pred_region
        %s164 = ssub.s32 %s16, 1
        // Predicated region
        $region29: #{tpu_custom_call.1} parent=27 // pred_check
          %p165 = pneg %p37
        $region30: #{tpu_custom_call.1} parent=27 // pred_check_branch
          %167 = sbr.rel (%p165) target = $region32
        $region31: #{tpu_custom_call.1} parent=27 // pred_region
          %168 = dma.done [#allocation3], 256
        $region32: #{tpu_custom_call.1} parent=27 // pred_fallthru
          _
        %s169 = sand.u32 %s50, 1
        %s170 = scalar_lea.sflag [#allocation7], %s169
        %s171 = sand.u32 %s50, 1
        %s172 = smul.addr %s171, 64
        %s173 = scalar_lea.vmem [#allocation6], %s172
        // Predicated region
        $region33: #{tpu_custom_call.1} parent=27 // pred_check
          %p174 = pneg %p63
        $region34: #{tpu_custom_call.1} parent=27 // pred_check_branch
          %176 = sbr.rel (%p174) target = $region36
        $region35: #{tpu_custom_call.1} parent=27 // pred_region
          %177 = dma.done %s170, 1024
        $region36: #{tpu_custom_call.1} parent=27 // pred_fallthru
          _
        %p178 = pneg %p37
        %p179 = pneg %p34
        %s180 = sand.u32 %s50, 1
        %s181 = scalar_lea.sflag [#allocation7], %s180
        %s182 = sand.u32 %s50, 1
        %s183 = smul.addr %s182, 64
        %s184 = scalar_lea.vmem [#allocation6], %s183
        %p185 = pneg %p63
        %p186 = pneg %p60
        %p187 = pneg %p84
        %p188 = pneg %p81
        %p189 = pneg %p105
        %p190 = pneg %p102
        %p192 = scmp.eq.s32.totalorder %s21, 0
        // Predicated region
        $region37: #{tpu_custom_call.1} parent=27 // pred_check
          %p193 = pneg %p192
        $region38: #{tpu_custom_call.1} parent=27 // pred_check_branch
          %195 = sbr.rel (%p193) target = $region40
        $region39: #{tpu_custom_call.1} parent=27 // pred_region
          %v196 = vld [vmem:[#allocation2] sm:$0xff]
          %v197 = vld [vmem:[#allocation2 + $0x8] sm:$0xff]
          %198 = vst [vmem:[#allocation8] sm:$0xff] %v196
          %199 = vst [vmem:[#allocation8 + $0x8] sm:$0xff] %v197
        $region40: #{tpu_custom_call.1} parent=27 // pred_fallthru
          _
        %v200 = vld [vmem:[#allocation8] sm:$0xff]
        %v201 = vld [vmem:[#allocation8 + $0x8] sm:$0xff]
        %v202 = vpack.c.bf16 %v201, %v200
        %v203 = vld [vmem:[%s173] sm:$0xf]
        %v204 = vld [vmem:[%s173 + $0x4] sm:$0xf]
        %v205 = vld [vmem:[%s173 + $0x8] sm:$0xf]
        %v206 = vld [vmem:[%s173 + $0xc] sm:$0xf]
        %v207 = vld [vmem:[%s173 + $0x10] sm:$0xf]
        %v208 = vld [vmem:[%s173 + $0x14] sm:$0xf]
        %v209 = vld [vmem:[%s173 + $0x18] sm:$0xf]
        %v210 = vld [vmem:[%s173 + $0x1c] sm:$0xf]
        %v211 = vld [vmem:[%s173 + $0x20] sm:$0xf]
        %v212 = vld [vmem:[%s173 + $0x24] sm:$0xf]
        %v213 = vld [vmem:[%s173 + $0x28] sm:$0xf]
        %v214 = vld [vmem:[%s173 + $0x2c] sm:$0xf]
        %v215 = vld [vmem:[%s173 + $0x30] sm:$0xf]
        %v216 = vld [vmem:[%s173 + $0x34] sm:$0xf]
        %v217 = vld [vmem:[%s173 + $0x38] sm:$0xf]
        %v218 = vld [vmem:[%s173 + $0x3c] sm:$0xf]
        %v235 = vunpack.c.l.b16 %v203
        %v236 = vunpack.c.l.b16 %v204
        %v237 = vunpack.c.l.b16 %v205
        %v238 = vunpack.c.l.b16 %v206
        %v239 = vunpack.c.l.b16 %v207
        %v240 = vunpack.c.l.b16 %v208
        %v241 = vunpack.c.l.b16 %v209
        %v242 = vunpack.c.l.b16 %v210
        %v243 = vunpack.c.l.b16 %v211
        %v244 = vunpack.c.l.b16 %v212
        %v245 = vunpack.c.l.b16 %v213
        %v246 = vunpack.c.l.b16 %v214
        %v247 = vunpack.c.l.b16 %v215
        %v248 = vunpack.c.l.b16 %v216
        %v249 = vunpack.c.l.b16 %v217
        %v250 = vunpack.c.l.b16 %v218
        %v251 = vpack.c.b16 %v236, %v235
        %v252 = vpack.c.b16 %v238, %v237
        %v253 = vpack.c.b16 %v240, %v239
        %v254 = vpack.c.b16 %v242, %v241
        %v255 = vpack.c.b16 %v244, %v243
        %v256 = vpack.c.b16 %v246, %v245
        %v257 = vpack.c.b16 %v248, %v247
        %v258 = vpack.c.b16 %v250, %v249
        %267 = vmatprep.subr.bf16.mxu0 0
        %268 = vmatpush1.bf16.msra.mxu0 %v251
        %269 = vmatprep.subr.bf16.mxu0 0
        %270 = vmatpush1.bf16.msra.mxu0 %v252
        %271 = vmatprep.subr.bf16.mxu0 0
        %272 = vmatpush1.bf16.msra.mxu0 %v253
        %273 = vmatprep.subr.bf16.mxu0 0
        %274 = vmatpush1.bf16.msra.mxu0 %v254
        %275 = vmatprep.subr.bf16.mxu0 0
        %276 = vmatpush1.bf16.msra.mxu0 %v255
        %277 = vmatprep.subr.bf16.mxu0 0
        %278 = vmatpush1.bf16.msra.mxu0 %v256
        %279 = vmatprep.subr.bf16.mxu0 0
        %280 = vmatpush1.bf16.msra.mxu0 %v257
        %281 = vmatprep.subr.bf16.mxu0 0
        %282 = vmatpush1.bf16.msra.mxu0 %v258
        %283 = vmatprep.subr.bf16.mxu0 0
        %284 = vmatpush1.bf16.msra.mxu0 0
        %285 = vmatprep.subr.bf16.mxu0 0
        %286 = vmatpush1.bf16.msra.mxu0 0
        %287 = vmatprep.subr.bf16.mxu0 0
        %288 = vmatpush1.bf16.msra.mxu0 0
        %289 = vmatprep.subr.bf16.mxu0 0
        %290 = vmatpush1.bf16.msra.mxu0 0
        %291 = vmatprep.subr.bf16.mxu0 0
        %292 = vmatpush1.bf16.msra.mxu0 0
        %293 = vmatprep.subr.bf16.mxu0 0
        %294 = vmatpush1.bf16.msra.mxu0 0
        %295 = vmatprep.subr.bf16.mxu0 0
        %296 = vmatpush1.bf16.msra.mxu0 0
        %297 = vmatprep.subr.bf16.mxu0 0
        %298 = vmatpush1.bf16.msra.mxu0 0
        %299 = vmatprep.mubr.bf16.mxu0 0
        %300 = vmatmul.mubr.bf16.gmra.mrb[0].mxu0 %v202
        %v301 = vpop.f32.mrb[0].mxu0
        %v302 = vadd.f32 0.0, %v301
        %v303 = vpop.f32.mrb[0].mxu0
        %v304 = vpop.f32.mrb[0].mxu0
        %v305 = vadd.f32 0.0, %v304
        %v306 = vpop.f32.mrb[0].mxu0
        %307 = vdwg.mxu0
        %v308 = vmax.f32 %v302, 0.0
        %v309 = vmax.f32 %v305, 0.0
        %310 = vst [vmem:[#allocation8] sm:$0xff] %v308
        %311 = vst [vmem:[#allocation8 + $0x8] sm:$0xff] %v309
        %v312 = vadd.f32 %v308, %v309
        %313 = vadd.xlane.f32.xlu0 %v312
        %v314 = vpop.xlane.xlu0 %313
        %v315 = vrot.slane %v314, 4
        %v316 = vadd.f32 %v314, %v315
        %v317 = vrot.slane %v316, 2
        %v318 = vadd.f32 %v316, %v317
        %v319 = vrot.slane %v318, 1
        %v320 = vadd.f32 %v318, %v319
        %s321 = vtos %v320
        %v322 = vrcp.pop 2048.0
        %s323 = vtos %v322
        %s324 = smul.f32 %s321, %s323
        %v325 = vstv %s324
        %v326 = vsub.f32 %v308, %v325
        %v327 = vsub.f32 %v309, %v325
        %v328 = vmul.f32 %v326, %v326
        %v329 = vmul.f32 %v327, %v327
        %v330 = vadd.f32 %v328, %v329
        %331 = vadd.xlane.f32.xlu0 %v330
        %v332 = vpop.xlane.xlu0 %331
        %v333 = vrot.slane %v332, 4
        %v334 = vadd.f32 %v332, %v333
        %v335 = vrot.slane %v334, 2
        %v336 = vadd.f32 %v334, %v335
        %v337 = vrot.slane %v336, 1
        %v338 = vadd.f32 %v336, %v337
        %s339 = vtos %v338
        %v340 = vrcp.pop 2047.0
        %s341 = vtos %v340
        %s342 = smul.f32 %s339, %s341
        %v343 = vstv %s342
        %v344 = vrsqrt.pop %v343
        %v345 = vmul.f32 %v343, %v344
        %vm346 = vcmp.eq.f32.partialorder %v343, inf
        %v347 = vsel %vm346, %v343, %v345
        %vm348 = vcmp.eq.f32.partialorder %v343, 0.0
        %v349 = vand.u32 %v343, 2147483648
        %v350 = vsel %vm348, %v349, %v347
        %s351 = vtos %v350
        %s352 = scalar_lea.smem [#allocation9], %s21
        %353 = sst [smem:[%s352]] %s351
        // Predicated region
        $region41: #{tpu_custom_call.1} parent=27 // pred_check
          %p354 = pneg %p81
        $region42: #{tpu_custom_call.1} parent=27 // pred_check_branch
          %356 = sbr.rel (%p354) target = $region44
        $region43: #{tpu_custom_call.1} parent=27 // pred_region
          %s358 = ssub.s32 256, 256
          %359 = vsyncadd [#allocation4], %s358
          %s360 = sshll.u32 [#allocation8], 4
          %s361 = int_to_ptr.vmem [resolvable:$true] %s360
          %366 = dma.vmem_to_hbm [thread:$0]  %s361, 256, %s2, [#allocation4], 128, 128, 8
        $region44: #{tpu_custom_call.1} parent=27 // pred_fallthru
          _
        // Predicated region
        $region45: #{tpu_custom_call.1} parent=27 // pred_check
          %p367 = pneg %p102
        $region46: #{tpu_custom_call.1} parent=27 // pred_check_branch
          %369 = sbr.rel (%p367) target = $region48
        $region47: #{tpu_custom_call.1} parent=27 // pred_region
          %s371 = ssub.s32 16, 16
          %372 = vsyncadd [#allocation5], %s371
          %375 = dma.smem_to_hbm [#allocation9], 16, %s3, [#allocation5]
        $region48: #{tpu_custom_call.1} parent=27 // pred_fallthru
          _
        // Predicated region
        $region49: #{tpu_custom_call.1} parent=27 // pred_check
          %p376 = pneg %p81
        $region50: #{tpu_custom_call.1} parent=27 // pred_check_branch
          %378 = sbr.rel (%p376) target = $region52
        $region51: #{tpu_custom_call.1} parent=27 // pred_region
          %379 = dma.done [#allocation4], 256
        $region52: #{tpu_custom_call.1} parent=27 // pred_fallthru
          _
        // Predicated region
        $region53: #{tpu_custom_call.1} parent=27 // pred_check
          %p380 = pneg %p102
        $region54: #{tpu_custom_call.1} parent=27 // pred_check_branch
          %382 = sbr.rel (%p380) target = $region56
        $region55: #{tpu_custom_call.1} parent=27 // pred_region
          %383 = dma.done [#allocation5], 16
        $region56: #{tpu_custom_call.1} parent=27 // pred_fallthru
          _
        %384 = sfence
      $region28: #{tpu_custom_call.1} parent=5 // pred_fallthru
        _
      %p385 = scmp.le.s32.totalorder 2, %s16
      // Predicated region
      $region57: #{tpu_custom_call.1} parent=5 // pred_check
        %p386 = pneg %p385
      $region58: #{tpu_custom_call.1} parent=5 // pred_check_branch
        %388 = sbr.rel (%p386) target = $region60
      $region59: #{tpu_custom_call.1} parent=5 // pred_region
        %s389 = ssub.s32 %s16, 2
      $region60: #{tpu_custom_call.1} parent=5 // pred_fallthru
        _
    $region6: #{tpu_custom_call.1} parent=1 // loop_footer
      %s20 = sadd.s32 1, %s16
    $region7: #{tpu_custom_call.1} parent=1 // loop_footer_branch
      %15 = sbr.rel target = $region3
    $region8: #{tpu_custom_call.1} parent=1 // loop_exit
      _
    %390 = vsyncpa [#allocation3], 1
    %s391 = scalar_lea.sflag [#allocation3], 1
    %392 = vsyncpa %s391, 1
    %393 = vsyncpa [#allocation7], 1
    %s394 = scalar_lea.sflag [#allocation7], 1
    %395 = vsyncpa %s394, 1
    %396 = vsyncpa [#allocation4], 1
    %s397 = scalar_lea.sflag [#allocation4], 1
    %398 = vsyncpa %s397, 1
    %399 = vsyncpa [#allocation5], 1
    %s400 = scalar_lea.sflag [#allocation5], 1
    %401 = vsyncpa %s400, 1

</llo_original>
